<compile_context>
chip_gen: v7x
topology: tpu7x:2x2x1
jax: 0.10.0
libtpu: 0.0.40
codegen_flags: <defaults>
</compile_context>

<pallas_src>
import functools

import jax
import jax.numpy as jnp
from jax.experimental import pallas as pl
from jax.experimental.pallas import tpu as pltpu

IN_DIM = 6
H1, H2, H3, OUT = 32, 24, 16, 1
BN_EPS = 1e-5
LEAKY_SLOPE = 0.1


def _leaky_relu(x, slope=LEAKY_SLOPE):
    return jnp.where(x > 0, x, slope * x)


def mlp_kernel(x_ref,
               w1_ref, b1_ref,
               w2_ref, b2_ref,
               w3_ref, b3_ref,
               w4_ref, b4_ref,
               o_ref):
    # x: (IN_DIM, batch_tile) bf16, batch on the lane axis.
    x = x_ref[...]

    # layer1: folded (Linear + BN) -> LeakyReLU   (Dropout == identity in eval)
    h = jnp.dot(w1_ref[...], x, preferred_element_type=jnp.float32) + b1_ref[...]
    h = _leaky_relu(h)

    # layer2
    h = jnp.dot(w2_ref[...], h.astype(jnp.bfloat16),
                preferred_element_type=jnp.float32) + b2_ref[...]
    h = _leaky_relu(h)

    # layer3
    h = jnp.dot(w3_ref[...], h.astype(jnp.bfloat16),
                preferred_element_type=jnp.float32) + b3_ref[...]
    h = _leaky_relu(h)

    # output layer: Linear(16,1) as broadcast-mul + sublane reduce (skips a
    # 1-row MXU pass), then Sigmoid with exp + approx reciprocal (EUP).
    z = jnp.sum(h * w4_ref[...], axis=0, keepdims=True) + b4_ref[...]
    o_ref[...] = pl.reciprocal(1.0 + jnp.exp(-z), approx=True).astype(o_ref.dtype)


def fold_params(raw_params):
    """Fold eval-mode BatchNorm (scale/shift) and the Linear bias into the
    weights. Weights of the three matmul layers are cast to bf16; biases and
    the final (VPU) projection stay f32."""
    (w1, b1, g1, be1, m1, v1,
     w2, b2, g2, be2, m2, v2,
     w3, b3, g3, be3, m3, v3,
     w4, b4) = raw_params

    def fold(w, b, gamma, beta, mean, var):
        scale = gamma / jnp.sqrt(var + BN_EPS)                   # (out,)
        shift = beta - mean * scale                              # (out,)
        wf = (w * scale[:, None]).astype(jnp.bfloat16)           # (out, in)
        bf = (b * scale + shift)[:, None].astype(jnp.float32)    # (out, 1)
        return wf, bf

    w1f, b1f = fold(w1, b1, g1, be1, m1, v1)
    w2f, b2f = fold(w2, b2, g2, be2, m2, v2)
    w3f, b3f = fold(w3, b3, g3, be3, m3, v3)
    w4f = jnp.transpose(w4).astype(jnp.float32)                  # (16, 1)
    b4f = jnp.reshape(b4, (1, 1)).astype(jnp.float32)            # (1, 1)
    return w1f, b1f, w2f, b2f, w3f, b3f, w4f, b4f


@functools.partial(jax.jit, static_argnames=("batch_tile",))
def net_forward(x, raw_params, *, batch_tile=1024):
    """x: (B, IN_DIM) f32 -> (B, 1) f32 sigmoid outputs."""
    B = x.shape[0]
    # Batch sits on the 128-lane axis -> the tile must be a multiple of 128.
    # Clamp to the (128-rounded) batch so small batches don't waste lanes.
    b_rounded = ((B + 127) // 128) * 128
    batch_tile = max(128, (min(batch_tile, b_rounded) // 128) * 128)
    Bp = ((B + batch_tile - 1) // batch_tile) * batch_tile

    (w1f, b1f, w2f, b2f, w3f, b3f, w4f, b4f) = fold_params(raw_params)

    # Batch on lanes, bf16 activations (halves the dominant HBM stream).
    x_t = jnp.transpose(x).astype(jnp.bfloat16)                  # (IN_DIM, B)
    if Bp != B:
        x_t = jnp.pad(x_t, ((0, 0), (0, Bp - B)))

    def full_spec(arr):
        # Whole-array block, same block index every grid step -> DMA'd once,
        # resident in VMEM for the whole grid.
        return pl.BlockSpec(arr.shape, lambda i: (0,) * arr.ndim)

    in_specs = [
        pl.BlockSpec((IN_DIM, batch_tile), lambda i: (0, i)),    # x tiled over batch lanes
        full_spec(w1f), full_spec(b1f),
        full_spec(w2f), full_spec(b2f),
        full_spec(w3f), full_spec(b3f),
        full_spec(w4f), full_spec(b4f),
    ]
    out_spec = pl.BlockSpec((OUT, batch_tile), lambda i: (0, i))  # lane-dense output

    out = pl.pallas_call(
        mlp_kernel,
        out_shape=jax.ShapeDtypeStruct((OUT, Bp), jnp.float32),
        grid_spec=pltpu.PrefetchScalarGridSpec(
            num_scalar_prefetch=0,
            grid=(Bp // batch_tile,),
            in_specs=in_specs,
            out_specs=out_spec,
        ),
        compiler_params=pltpu.CompilerParams(
            dimension_semantics=("parallel",)),   # shards grid steps across TCs on v7x
    )(x_t, w1f, b1f, w2f, b2f, w3f, b3f, w4f, b4f)

    # back to the PyTorch layout (B, 1)
    return jnp.transpose(out[:, :B])


def init_params(key):
    """PyTorch-default init: Linear weight (out,in) and bias (out,) ~ U(+-1/sqrt(fan_in));
    BatchNorm1d defaults gamma=1, beta=0, running_mean=0, running_var=1."""
    dims = [(IN_DIM, H1), (H1, H2), (H2, H3), (H3, OUT)]
    keys = jax.random.split(key, 2 * len(dims))
    params = []
    for li, (fan_in, fan_out) in enumerate(dims):
        bound = 1.0 / float(fan_in) ** 0.5
        w = jax.random.uniform(keys[2 * li], (fan_out, fan_in),
                               minval=-bound, maxval=bound, dtype=jnp.float32)
        b = jax.random.uniform(keys[2 * li + 1], (fan_out,),
                               minval=-bound, maxval=bound, dtype=jnp.float32)
        params += [w, b]
        if li < 3:  # layers 1-3 have BatchNorm1d, output layer does not
            params += [jnp.ones((fan_out,), jnp.float32),    # gamma
                       jnp.zeros((fan_out,), jnp.float32),   # beta
                       jnp.zeros((fan_out,), jnp.float32),   # running_mean
                       jnp.ones((fan_out,), jnp.float32)]    # running_var
    return tuple(params)


def net_reference(x, raw_params):
    """Pure-JAX f32 reference of the eval-mode forward pass."""
    (w1, b1, g1, be1, m1, v1,
     w2, b2, g2, be2, m2, v2,
     w3, b3, g3, be3, m3, v3,
     w4, b4) = raw_params

    def layer(h, w, b, gamma, beta, mean, var):
        h = h @ w.T + b
        h = gamma * (h - mean) / jnp.sqrt(var + BN_EPS) + beta
        return jnp.where(h > 0, h, LEAKY_SLOPE * h)

    h = layer(x, w1, b1, g1, be1, m1, v1)
    h = layer(h, w2, b2, g2, be2, m2, v2)
    h = layer(h, w3, b3, g3, be3, m3, v3)
    z = h @ w4.T + b4
    return jax.nn.sigmoid(z)


if __name__ == "__main__":
    key = jax.random.PRNGKey(0)
    pkey, xkey = jax.random.split(key)

    raw = init_params(pkey)

    batch = 64
    x = jax.random.normal(xkey, (batch, IN_DIM), dtype=jnp.float32)

    y = net_forward(x, raw)
    y = jax.block_until_ready(y)
    assert y.shape == (batch, OUT) and y.dtype == jnp.float32

    y_ref = net_reference(x, raw)
    max_err = float(jnp.max(jnp.abs(y - y_ref)))
    assert max_err < 5e-2, f"max abs err vs f32 reference: {max_err}"
    assert bool(jnp.all((y >= 0.0) & (y <= 1.0)))
    print("KERNEL_OK")
</pallas_src>

<mosaic_0001>
module attributes {stable_mosaic.version = 11 : i64} {
  func.func @mlp_kernel(%arg0: i32, %arg1: memref<6x128xbf16, #tpu.memory_space<vmem>>, %arg2: memref<32x6xbf16, #tpu.memory_space<vmem>>, %arg3: memref<32x1xf32, #tpu.memory_space<vmem>>, %arg4: memref<24x32xbf16, #tpu.memory_space<vmem>>, %arg5: memref<24x1xf32, #tpu.memory_space<vmem>>, %arg6: memref<16x24xbf16, #tpu.memory_space<vmem>>, %arg7: memref<16x1xf32, #tpu.memory_space<vmem>>, %arg8: memref<16x1xf32, #tpu.memory_space<vmem>>, %arg9: memref<1x1xf32, #tpu.memory_space<vmem>>, %arg10: memref<1x128xf32, #tpu.memory_space<vmem>>) attributes {dimension_semantics = [#tpu.dimension_semantics<parallel>], iteration_bounds = array<i64: 1>, scalar_prefetch = 0 : i64, scratch_operands = 0 : i64, tpu.core_type = #tpu.core_type<tc>, window_params = [{transform_indices = @transform_0, window_bounds = array<i64: 6, 128>}, {pipeline_mode = #tpu.pipeline_mode<synchronous>, transform_indices = @transform_1, window_bounds = array<i64: 32, 6>}, {pipeline_mode = #tpu.pipeline_mode<synchronous>, transform_indices = @transform_2, window_bounds = array<i64: 32, 1>}, {pipeline_mode = #tpu.pipeline_mode<synchronous>, transform_indices = @transform_3, window_bounds = array<i64: 24, 32>}, {pipeline_mode = #tpu.pipeline_mode<synchronous>, transform_indices = @transform_4, window_bounds = array<i64: 24, 1>}, {pipeline_mode = #tpu.pipeline_mode<synchronous>, transform_indices = @transform_5, window_bounds = array<i64: 16, 24>}, {pipeline_mode = #tpu.pipeline_mode<synchronous>, transform_indices = @transform_6, window_bounds = array<i64: 16, 1>}, {pipeline_mode = #tpu.pipeline_mode<synchronous>, transform_indices = @transform_7, window_bounds = array<i64: 16, 1>}, {pipeline_mode = #tpu.pipeline_mode<synchronous>, transform_indices = @transform_8, window_bounds = array<i64: 1, 1>}, {transform_indices = @transform_9, window_bounds = array<i64: 1, 128>}]} {
    %c0 = arith.constant 0 : index
    %c0_0 = arith.constant 0 : index
    %0 = vector.load %arg1[%c0, %c0_0] : memref<6x128xbf16, #tpu.memory_space<vmem>>, vector<6x128xbf16>
    %c0_1 = arith.constant 0 : index
    %c0_2 = arith.constant 0 : index
    %1 = vector.load %arg2[%c0_1, %c0_2] : memref<32x6xbf16, #tpu.memory_space<vmem>>, vector<32x6xbf16>
    %cst = arith.constant dense<0.000000e+00> : vector<32x128xf32>
    %2 = tpu.matmul %1, %0, %cst {dimension_numbers = #tpu.dot_dimension_numbers<[1], [0], [0], [1], [0, 0, 1, 1], [], []>} : vector<32x6xbf16>, vector<6x128xbf16>, vector<32x128xf32> -> vector<32x128xf32>
    %c0_3 = arith.constant 0 : index
    %c0_4 = arith.constant 0 : index
    %3 = vector.load %arg3[%c0_3, %c0_4] : memref<32x1xf32, #tpu.memory_space<vmem>>, vector<32x1xf32>
    %4 = vector.broadcast %3 : vector<32x1xf32> to vector<32x128xf32>
    %5 = arith.addf %2, %4 : vector<32x128xf32>
    %cst_5 = arith.constant 0.000000e+00 : f32
    %6 = vector.broadcast %cst_5 : f32 to vector<32x128xf32>
    %7 = arith.cmpf ogt, %5, %6 : vector<32x128xf32>
    %cst_6 = arith.constant 1.000000e-01 : f32
    %8 = vector.broadcast %cst_6 : f32 to vector<32x128xf32>
    %9 = arith.mulf %8, %5 : vector<32x128xf32>
    %10 = arith.select %7, %5, %9 : vector<32x128xi1>, vector<32x128xf32>
    %c0_7 = arith.constant 0 : index
    %c0_8 = arith.constant 0 : index
    %11 = vector.load %arg4[%c0_7, %c0_8] : memref<24x32xbf16, #tpu.memory_space<vmem>>, vector<24x32xbf16>
    %12 = arith.truncf %10 : vector<32x128xf32> to vector<32x128xbf16>
    %cst_9 = arith.constant dense<0.000000e+00> : vector<24x128xf32>
    %13 = tpu.matmul %11, %12, %cst_9 {dimension_numbers = #tpu.dot_dimension_numbers<[1], [0], [0], [1], [0, 0, 1, 1], [], []>} : vector<24x32xbf16>, vector<32x128xbf16>, vector<24x128xf32> -> vector<24x128xf32>
    %c0_10 = arith.constant 0 : index
    %c0_11 = arith.constant 0 : index
    %14 = vector.load %arg5[%c0_10, %c0_11] : memref<24x1xf32, #tpu.memory_space<vmem>>, vector<24x1xf32>
    %15 = vector.broadcast %14 : vector<24x1xf32> to vector<24x128xf32>
    %16 = arith.addf %13, %15 : vector<24x128xf32>
    %cst_12 = arith.constant 0.000000e+00 : f32
    %17 = vector.broadcast %cst_12 : f32 to vector<24x128xf32>
    %18 = arith.cmpf ogt, %16, %17 : vector<24x128xf32>
    %cst_13 = arith.constant 1.000000e-01 : f32
    %19 = vector.broadcast %cst_13 : f32 to vector<24x128xf32>
    %20 = arith.mulf %19, %16 : vector<24x128xf32>
    %21 = arith.select %18, %16, %20 : vector<24x128xi1>, vector<24x128xf32>
    %c0_14 = arith.constant 0 : index
    %c0_15 = arith.constant 0 : index
    %22 = vector.load %arg6[%c0_14, %c0_15] : memref<16x24xbf16, #tpu.memory_space<vmem>>, vector<16x24xbf16>
    %23 = arith.truncf %21 : vector<24x128xf32> to vector<24x128xbf16>
    %cst_16 = arith.constant dense<0.000000e+00> : vector<16x128xf32>
    %24 = tpu.matmul %22, %23, %cst_16 {dimension_numbers = #tpu.dot_dimension_numbers<[1], [0], [0], [1], [0, 0, 1, 1], [], []>} : vector<16x24xbf16>, vector<24x128xbf16>, vector<16x128xf32> -> vector<16x128xf32>
    %c0_17 = arith.constant 0 : index
    %c0_18 = arith.constant 0 : index
    %25 = vector.load %arg7[%c0_17, %c0_18] : memref<16x1xf32, #tpu.memory_space<vmem>>, vector<16x1xf32>
    %26 = vector.broadcast %25 : vector<16x1xf32> to vector<16x128xf32>
    %27 = arith.addf %24, %26 : vector<16x128xf32>
    %cst_19 = arith.constant 0.000000e+00 : f32
    %28 = vector.broadcast %cst_19 : f32 to vector<16x128xf32>
    %29 = arith.cmpf ogt, %27, %28 : vector<16x128xf32>
    %cst_20 = arith.constant 1.000000e-01 : f32
    %30 = vector.broadcast %cst_20 : f32 to vector<16x128xf32>
    %31 = arith.mulf %30, %27 : vector<16x128xf32>
    %32 = arith.select %29, %27, %31 : vector<16x128xi1>, vector<16x128xf32>
    %c0_21 = arith.constant 0 : index
    %c0_22 = arith.constant 0 : index
    %33 = vector.load %arg8[%c0_21, %c0_22] : memref<16x1xf32, #tpu.memory_space<vmem>>, vector<16x1xf32>
    %34 = vector.broadcast %33 : vector<16x1xf32> to vector<16x128xf32>
    %35 = arith.mulf %32, %34 : vector<16x128xf32>
    %cst_23 = arith.constant dense<0.000000e+00> : vector<128xf32>
    %36 = vector.multi_reduction <add>, %35, %cst_23 [0] : vector<16x128xf32> to vector<128xf32>
    %37 = vector.shape_cast %36 : vector<128xf32> to vector<1x128xf32>
    %c0_24 = arith.constant 0 : index
    %c0_25 = arith.constant 0 : index
    %38 = vector.load %arg9[%c0_24, %c0_25] : memref<1x1xf32, #tpu.memory_space<vmem>>, vector<1x1xf32>
    %39 = vector.broadcast %38 : vector<1x1xf32> to vector<1x128xf32>
    %40 = arith.addf %37, %39 : vector<1x128xf32>
    %cst_26 = arith.constant 0.000000e+00 : f32
    %41 = vector.broadcast %cst_26 : f32 to vector<1x128xf32>
    %42 = arith.subf %41, %40 : vector<1x128xf32>
    %43 = math.exp %42 : vector<1x128xf32>
    %cst_27 = arith.constant 1.000000e+00 : f32
    %44 = vector.broadcast %cst_27 : f32 to vector<1x128xf32>
    %45 = arith.addf %44, %43 : vector<1x128xf32>
    %46 = tpu.reciprocal %45 {approx = true} : vector<1x128xf32> -> vector<1x128xf32>
    %c0_28 = arith.constant 0 : index
    %c0_29 = arith.constant 0 : index
    %47 = vector.load %arg10[%c0_28, %c0_29] : memref<1x128xf32, #tpu.memory_space<vmem>>, vector<1x128xf32>
    tpu.vector_store %arg10[%c0_28, %c0_29], %46 {strides = array<i32>} : memref<1x128xf32, #tpu.memory_space<vmem>>, vector<1x128xf32>,
    return
  }
  func.func @transform_0(%arg0: i32) -> (i32, i32) {
    %c0_i32 = arith.constant 0 : i32
    %c0_i32_0 = arith.constant 0 : i32
    return %c0_i32, %arg0 : i32, i32
  }
  func.func @transform_1(%arg0: i32) -> (i32, i32) {
    %c0_i32 = arith.constant 0 : i32
    %c0_i32_0 = arith.constant 0 : i32
    %c0_i32_1 = arith.constant 0 : i32
    return %c0_i32, %c0_i32_0 : i32, i32
  }
  func.func @transform_2(%arg0: i32) -> (i32, i32) {
    %c0_i32 = arith.constant 0 : i32
    %c0_i32_0 = arith.constant 0 : i32
    %c0_i32_1 = arith.constant 0 : i32
    return %c0_i32, %c0_i32_0 : i32, i32
  }
  func.func @transform_3(%arg0: i32) -> (i32, i32) {
    %c0_i32 = arith.constant 0 : i32
    %c0_i32_0 = arith.constant 0 : i32
    %c0_i32_1 = arith.constant 0 : i32
    return %c0_i32, %c0_i32_0 : i32, i32
  }
  func.func @transform_4(%arg0: i32) -> (i32, i32) {
    %c0_i32 = arith.constant 0 : i32
    %c0_i32_0 = arith.constant 0 : i32
    %c0_i32_1 = arith.constant 0 : i32
    return %c0_i32, %c0_i32_0 : i32, i32
  }
  func.func @transform_5(%arg0: i32) -> (i32, i32) {
    %c0_i32 = arith.constant 0 : i32
    %c0_i32_0 = arith.constant 0 : i32
    %c0_i32_1 = arith.constant 0 : i32
    return %c0_i32, %c0_i32_0 : i32, i32
  }
  func.func @transform_6(%arg0: i32) -> (i32, i32) {
    %c0_i32 = arith.constant 0 : i32
    %c0_i32_0 = arith.constant 0 : i32
    %c0_i32_1 = arith.constant 0 : i32
    return %c0_i32, %c0_i32_0 : i32, i32
  }
  func.func @transform_7(%arg0: i32) -> (i32, i32) {
    %c0_i32 = arith.constant 0 : i32
    %c0_i32_0 = arith.constant 0 : i32
    %c0_i32_1 = arith.constant 0 : i32
    return %c0_i32, %c0_i32_0 : i32, i32
  }
  func.func @transform_8(%arg0: i32) -> (i32, i32) {
    %c0_i32 = arith.constant 0 : i32
    %c0_i32_0 = arith.constant 0 : i32
    %c0_i32_1 = arith.constant 0 : i32
    return %c0_i32, %c0_i32_0 : i32, i32
  }
  func.func @transform_9(%arg0: i32) -> (i32, i32) {
    %c0_i32 = arith.constant 0 : i32
    %c0_i32_0 = arith.constant 0 : i32
    return %c0_i32, %arg0 : i32, i32
  }
}

</mosaic_0001>

<llo_original>
// kernel: net_forward.1
$region0: #{net_forward.1}
  #allocation0 [shape = 'u32[]', space=smem, size = 0x4, offset = 0x4, fixed_abs, tag = 'smem constant byte address 0x4 - core index']
  #allocation1 [shape = 'u32[144,128]{1,0:T(1,128)}', space=vmem, size = 0x12000, scoped, tag = 'internal scratch']
  #allocation2 [shape = 'f32[1,1]{1,0:T(1,128)S(1)}', space=vmem, size = 0x200, scoped, tag = 'scoped memory for net_forward.1']
  %s0 = inlined_call_operand.vmem [shape: bf16[6,128], index: 0, kind: input, shape index: {}]
  %s1 = inlined_call_operand.vmem [shape: bf16[32,6], index: 1, kind: input, shape index: {}]
  %s2 = inlined_call_operand.vmem [shape: f32[32,1], index: 2, kind: input, shape index: {}]
  %s3 = inlined_call_operand.vmem [shape: bf16[24,32], index: 3, kind: input, shape index: {}]
  %s4 = inlined_call_operand.vmem [shape: f32[24,1], index: 4, kind: input, shape index: {}]
  %s5 = inlined_call_operand.vmem [shape: bf16[16,24], index: 5, kind: input, shape index: {}]
  %s6 = inlined_call_operand.vmem [shape: f32[16,1], index: 6, kind: input, shape index: {}]
  %s7 = inlined_call_operand.vmem [shape: f32[16,1], index: 7, kind: input, shape index: {}]
  %s8 = inlined_call_operand.<no memory space> [shape: f32[1,1], index: 8, kind: input, shape index: {}]
  %s9 = inlined_call_operand.vmem [shape: f32[1,128], index: 9, kind: output, shape index: {}]
  %s10 = sld [smem:[#allocation0]]
  $region46: #{net_forward.1} parent=0
    _
  %s12 = ssub.s32 1, %s10
  %s13 = scalar_select 0, %s12, %s10
  %v14 = vstv %s8
  %15 = vst [vmem:[#allocation2] sm:$0x1] %v14
  // Predicated region
  $region2: #{net_forward.1} parent=0 // pred_check
    _
  $region3: #{net_forward.1} parent=0 // pred_check_branch
    %17 = sbr.rel (0) target = $region5
  $region4: #{net_forward.1} parent=0 // pred_region
    _
  $region5: #{net_forward.1} parent=0 // pred_fallthru
    _
  // Predicated region
  $region6: #{net_forward.1} parent=0 // pred_check
    _
  $region7: #{net_forward.1} parent=0 // pred_check_branch
    %19 = sbr.rel (0) target = $region9
  $region8: #{net_forward.1} parent=0 // pred_region
    _
  $region9: #{net_forward.1} parent=0 // pred_fallthru
    _
  // Predicated region
  $region10: #{net_forward.1} parent=0 // pred_check
    _
  $region11: #{net_forward.1} parent=0 // pred_check_branch
    %21 = sbr.rel (0) target = $region13
  $region12: #{net_forward.1} parent=0 // pred_region
    _
  $region13: #{net_forward.1} parent=0 // pred_fallthru
    _
  // Predicated region
  $region14: #{net_forward.1} parent=0 // pred_check
    _
  $region15: #{net_forward.1} parent=0 // pred_check_branch
    %23 = sbr.rel (0) target = $region17
  $region16: #{net_forward.1} parent=0 // pred_region
    _
  $region17: #{net_forward.1} parent=0 // pred_fallthru
    _
  // Predicated region
  $region18: #{net_forward.1} parent=0 // pred_check
    _
  $region19: #{net_forward.1} parent=0 // pred_check_branch
    %25 = sbr.rel (0) target = $region21
  $region20: #{net_forward.1} parent=0 // pred_region
    _
  $region21: #{net_forward.1} parent=0 // pred_fallthru
    _
  // Predicated region
  $region22: #{net_forward.1} parent=0 // pred_check
    _
  $region23: #{net_forward.1} parent=0 // pred_check_branch
    %27 = sbr.rel (0) target = $region25
  $region24: #{net_forward.1} parent=0 // pred_region
    _
  $region25: #{net_forward.1} parent=0 // pred_fallthru
    _
  // Predicated region
  $region26: #{net_forward.1} parent=0 // pred_check
    _
  $region27: #{net_forward.1} parent=0 // pred_check_branch
    %29 = sbr.rel (0) target = $region29
  $region28: #{net_forward.1} parent=0 // pred_region
    _
  $region29: #{net_forward.1} parent=0 // pred_fallthru
    _
  // Predicated region
  $region30: #{net_forward.1} parent=0 // pred_check
    _
  $region31: #{net_forward.1} parent=0 // pred_check_branch
    %31 = sbr.rel (0) target = $region33
  $region32: #{net_forward.1} parent=0 // pred_region
    _
  $region33: #{net_forward.1} parent=0 // pred_fallthru
    _
  // Predicated region
  $region34: #{net_forward.1} parent=0 // pred_check
    _
  $region35: #{net_forward.1} parent=0 // pred_check_branch
    %33 = sbr.rel (0) target = $region37
  $region36: #{net_forward.1} parent=0 // pred_region
    _
  $region37: #{net_forward.1} parent=0 // pred_fallthru
    _
  %v35 = vld [vmem:[%s0] sm:$0x7]
  %v36 = vld [vmem:[%s1] sm:$0xf]
  %v37 = vld [vmem:[%s1 + $0x4] sm:$0xf]
  %v38 = vld [vmem:[%s1 + $0x8] sm:$0xf]
  %v39 = vld [vmem:[%s1 + $0xc] sm:$0xf]
  %v40 = vld [vmem:[%s2] sm:$0xff]
  %v41 = vld [vmem:[%s2 + $0x8] sm:$0xff]
  %v42 = vld [vmem:[%s2 + $0x10] sm:$0xff]
  %v43 = vld [vmem:[%s2 + $0x18] sm:$0xff]
  %45 = vset.pattern.permute.xlu0 0
  %46 = vperm.xlu0 %45, %v40
  %v47 = vpop.permute.xlu0 %46
  %50 = vset.pattern.permute.xlu0 0
  %51 = vperm.xlu0 %50, %v41
  %v52 = vpop.permute.xlu0 %51
  %55 = vset.pattern.permute.xlu0 0
  %56 = vperm.xlu0 %55, %v42
  %v57 = vpop.permute.xlu0 %56
  %60 = vset.pattern.permute.xlu0 0
  %61 = vperm.xlu0 %60, %v43
  %v62 = vpop.permute.xlu0 %61
  %v68 = vunpack.c.l.b16 %v36
  %v69 = vunpack.c.l.b16 %v37
  %v70 = vunpack.c.l.b16 %v38
  %v71 = vunpack.c.l.b16 %v39
  %v72 = vpack.c.b16 %v69, %v68
  %v73 = vpack.c.b16 %v71, %v70
  %vm74 = vcmask 48128
  %v76 = vsel %vm74, %v72, 0
  %v79 = vsel %vm74, %v73, 0
  %vm81 = vcmask 1042432
  %v83 = vsel %vm81, %v35, 0
  %85 = vmatprep.subr.bf16.mxu0 0
  %86 = vmatpush1.bf16.msra.mxu0 %v83
  %87 = vmatprep.subr.bf16.mxu0 0
  %88 = vmatpush1.bf16.msra.mxu0 0
  %89 = vmatprep.subr.bf16.mxu0 0
  %90 = vmatpush1.bf16.msra.mxu0 0
  %91 = vmatprep.subr.bf16.mxu0 0
  %92 = vmatpush1.bf16.msra.mxu0 0
  %93 = vmatprep.subr.bf16.mxu0 0
  %94 = vmatpush1.bf16.msra.mxu0 0
  %95 = vmatprep.subr.bf16.mxu0 0
  %96 = vmatpush1.bf16.msra.mxu0 0
  %97 = vmatprep.subr.bf16.mxu0 0
  %98 = vmatpush1.bf16.msra.mxu0 0
  %99 = vmatprep.subr.bf16.mxu0 0
  %100 = vmatpush1.bf16.msra.mxu0 0
  %101 = vmatprep.subr.bf16.mxu0 0
  %102 = vmatpush1.bf16.msra.mxu0 0
  %103 = vmatprep.subr.bf16.mxu0 0
  %104 = vmatpush1.bf16.msra.mxu0 0
  %105 = vmatprep.subr.bf16.mxu0 0
  %106 = vmatpush1.bf16.msra.mxu0 0
  %107 = vmatprep.subr.bf16.mxu0 0
  %108 = vmatpush1.bf16.msra.mxu0 0
  %109 = vmatprep.subr.bf16.mxu0 0
  %110 = vmatpush1.bf16.msra.mxu0 0
  %111 = vmatprep.subr.bf16.mxu0 0
  %112 = vmatpush1.bf16.msra.mxu0 0
  %113 = vmatprep.subr.bf16.mxu0 0
  %114 = vmatpush1.bf16.msra.mxu0 0
  %115 = vmatprep.subr.bf16.mxu0 0
  %116 = vmatpush1.bf16.msra.mxu0 0
  %117 = vmatprep.mubr.bf16.mxu0 0
  %118 = vmatmul.mubr.bf16.gmra.mrb[0].mxu0 %v76
  %v119 = vpop.f32.mrb[0].mxu0
  %v120 = vadd.f32 %v47, %v119
  %v121 = vpop.f32.mrb[0].mxu0
  %v122 = vpop.f32.mrb[0].mxu0
  %v123 = vadd.f32 %v52, %v122
  %v124 = vpop.f32.mrb[0].mxu0
  %125 = vmatprep.mubr.bf16.mxu0 0
  %126 = vmatmul.mubr.bf16.gmra.mrb[0].mxu0 %v79
  %v127 = vpop.f32.mrb[0].mxu0
  %v128 = vadd.f32 %v57, %v127
  %v129 = vpop.f32.mrb[0].mxu0
  %v130 = vpop.f32.mrb[0].mxu0
  %v131 = vadd.f32 %v62, %v130
  %v132 = vpop.f32.mrb[0].mxu0
  %133 = vdwg.mxu0
  %vm134 = vcmp.gt.f32.partialorder %v120, 0.0
  %vm135 = vcmp.gt.f32.partialorder %v123, 0.0
  %vm136 = vcmp.gt.f32.partialorder %v128, 0.0
  %vm137 = vcmp.gt.f32.partialorder %v131, 0.0
  %v138 = vmul.f32 %v120, 0.1
  %v139 = vmul.f32 %v123, 0.1
  %v140 = vmul.f32 %v128, 0.1
  %v141 = vmul.f32 %v131, 0.1
  %v142 = vsel %vm134, %v120, %v138
  %v143 = vsel %vm135, %v123, %v139
  %v144 = vsel %vm136, %v128, %v140
  %v145 = vsel %vm137, %v131, %v141
  %v146 = vld [vmem:[%s3] sm:$0xf]
  %v147 = vld [vmem:[%s3 + $0x4] sm:$0xf]
  %v148 = vld [vmem:[%s3 + $0x8] sm:$0xf]
  %v149 = vpack.c.bf16 %v143, %v142
  %v150 = vpack.c.bf16 %v145, %v144
  %v151 = vld [vmem:[%s4] sm:$0xff]
  %v152 = vld [vmem:[%s4 + $0x8] sm:$0xff]
  %v153 = vld [vmem:[%s4 + $0x10] sm:$0xff]
  %155 = vset.pattern.permute.xlu0 0
  %156 = vperm.xlu0 %155, %v151
  %v157 = vpop.permute.xlu0 %156
  %160 = vset.pattern.permute.xlu0 0
  %161 = vperm.xlu0 %160, %v152
  %v162 = vpop.permute.xlu0 %161
  %165 = vset.pattern.permute.xlu0 0
  %166 = vperm.xlu0 %165, %v153
  %v167 = vpop.permute.xlu0 %166
  %v172 = vunpack.c.l.b16 %v146
  %v173 = vunpack.c.l.b16 %v147
  %v174 = vunpack.c.l.b16 %v148
  %v175 = vpack.c.b16 %v173, %v172
  %v176 = vpack.c.b16 %v174, %v174
  %vm177 = vcmask 261120
  %v179 = vsel %vm177, %v175, 0
  %v182 = vsel %vm177, %v176, 0
  %184 = vmatprep.subr.bf16.mxu0 0
  %185 = vmatpush1.bf16.msra.mxu0 %v149
  %186 = vmatprep.subr.bf16.mxu0 0
  %187 = vmatpush1.bf16.msra.mxu0 %v150
  %188 = vmatprep.subr.bf16.mxu0 0
  %189 = vmatpush1.bf16.msra.mxu0 0
  %190 = vmatprep.subr.bf16.mxu0 0
  %191 = vmatpush1.bf16.msra.mxu0 0
  %192 = vmatprep.subr.bf16.mxu0 0
  %193 = vmatpush1.bf16.msra.mxu0 0
  %194 = vmatprep.subr.bf16.mxu0 0
  %195 = vmatpush1.bf16.msra.mxu0 0
  %196 = vmatprep.subr.bf16.mxu0 0
  %197 = vmatpush1.bf16.msra.mxu0 0
  %198 = vmatprep.subr.bf16.mxu0 0
  %199 = vmatpush1.bf16.msra.mxu0 0
  %200 = vmatprep.subr.bf16.mxu0 0
  %201 = vmatpush1.bf16.msra.mxu0 0
  %202 = vmatprep.subr.bf16.mxu0 0
  %203 = vmatpush1.bf16.msra.mxu0 0
  %204 = vmatprep.subr.bf16.mxu0 0
  %205 = vmatpush1.bf16.msra.mxu0 0
  %206 = vmatprep.subr.bf16.mxu0 0
  %207 = vmatpush1.bf16.msra.mxu0 0
  %208 = vmatprep.subr.bf16.mxu0 0
  %209 = vmatpush1.bf16.msra.mxu0 0
  %210 = vmatprep.subr.bf16.mxu0 0
  %211 = vmatpush1.bf16.msra.mxu0 0
  %212 = vmatprep.subr.bf16.mxu0 0
  %213 = vmatpush1.bf16.msra.mxu0 0
  %214 = vmatprep.subr.bf16.mxu0 0
  %215 = vmatpush1.bf16.msra.mxu0 0
  %216 = vmatprep.mubr.bf16.mxu0 0
  %217 = vmatmul.mubr.bf16.gmra.mrb[0].mxu0 %v179
  %v218 = vpop.f32.mrb[0].mxu0
  %v219 = vadd.f32 %v157, %v218
  %v220 = vpop.f32.mrb[0].mxu0
  %v221 = vpop.f32.mrb[0].mxu0
  %v222 = vadd.f32 %v162, %v221
  %v223 = vpop.f32.mrb[0].mxu0
  %224 = vmatprep.mubr.bf16.mxu0 0
  %225 = vmatmul.mubr.bf16.gmra.mrb[0].mxu0 %v182
  %v226 = vpop.f32.mrb[0].mxu0
  %v227 = vadd.f32 %v167, %v226
  %v228 = vpop.f32.mrb[0].mxu0
  %v229 = vpop.f32.mrb[0].mxu0
  %v230 = vpop.f32.mrb[0].mxu0
  %231 = vdwg.mxu0
  %vm232 = vcmp.gt.f32.partialorder %v219, 0.0
  %vm233 = vcmp.gt.f32.partialorder %v222, 0.0
  %vm234 = vcmp.gt.f32.partialorder %v227, 0.0
  %v235 = vmul.f32 %v219, 0.1
  %v236 = vmul.f32 %v222, 0.1
  %v237 = vmul.f32 %v227, 0.1
  %v238 = vsel %vm232, %v219, %v235
  %v239 = vsel %vm233, %v222, %v236
  %v240 = vsel %vm234, %v227, %v237
  %v241 = vld [vmem:[%s5] sm:$0xf]
  %v242 = vld [vmem:[%s5 + $0x4] sm:$0xf]
  %v243 = vpack.c.bf16 %v239, %v238
  %v244 = vpack.c.bf16 %v240, %v240
  %v245 = vld [vmem:[%s6] sm:$0xff]
  %v246 = vld [vmem:[%s6 + $0x8] sm:$0xff]
  %248 = vset.pattern.permute.xlu0 0
  %249 = vperm.xlu0 %248, %v245
  %v250 = vpop.permute.xlu0 %249
  %253 = vset.pattern.permute.xlu0 0
  %254 = vperm.xlu0 %253, %v246
  %v255 = vpop.permute.xlu0 %254
  %v259 = vunpack.c.l.b16 %v241
  %v260 = vunpack.c.l.b16 %v242
  %v261 = vpack.c.b16 %v260, %v259
  %vm262 = vcmask 195584
  %v264 = vsel %vm262, %v261, 0
  %vm266 = vcmask 1043456
  %v268 = vsel %vm266, %v244, 0
  %270 = vmatprep.subr.bf16.mxu0 0
  %271 = vmatpush1.bf16.msra.mxu0 %v243
  %272 = vmatprep.subr.bf16.mxu0 0
  %273 = vmatpush1.bf16.msra.mxu0 %v268
  %274 = vmatprep.subr.bf16.mxu0 0
  %275 = vmatpush1.bf16.msra.mxu0 0
  %276 = vmatprep.subr.bf16.mxu0 0
  %277 = vmatpush1.bf16.msra.mxu0 0
  %278 = vmatprep.subr.bf16.mxu0 0
  %279 = vmatpush1.bf16.msra.mxu0 0
  %280 = vmatprep.subr.bf16.mxu0 0
  %281 = vmatpush1.bf16.msra.mxu0 0
  %282 = vmatprep.subr.bf16.mxu0 0
  %283 = vmatpush1.bf16.msra.mxu0 0
  %284 = vmatprep.subr.bf16.mxu0 0
  %285 = vmatpush1.bf16.msra.mxu0 0
  %286 = vmatprep.subr.bf16.mxu0 0
  %287 = vmatpush1.bf16.msra.mxu0 0
  %288 = vmatprep.subr.bf16.mxu0 0
  %289 = vmatpush1.bf16.msra.mxu0 0
  %290 = vmatprep.subr.bf16.mxu0 0
  %291 = vmatpush1.bf16.msra.mxu0 0
  %292 = vmatprep.subr.bf16.mxu0 0
  %293 = vmatpush1.bf16.msra.mxu0 0
  %294 = vmatprep.subr.bf16.mxu0 0
  %295 = vmatpush1.bf16.msra.mxu0 0
  %296 = vmatprep.subr.bf16.mxu0 0
  %297 = vmatpush1.bf16.msra.mxu0 0
  %298 = vmatprep.subr.bf16.mxu0 0
  %299 = vmatpush1.bf16.msra.mxu0 0
  %300 = vmatprep.subr.bf16.mxu0 0
  %301 = vmatpush1.bf16.msra.mxu0 0
  %302 = vmatprep.mubr.bf16.mxu0 0
  %303 = vmatmul.mubr.bf16.gmra.mrb[0].mxu0 %v264
  %v304 = vpop.f32.mrb[0].mxu0
  %v305 = vadd.f32 %v250, %v304
  %v306 = vpop.f32.mrb[0].mxu0
  %v307 = vpop.f32.mrb[0].mxu0
  %v308 = vadd.f32 %v255, %v307
  %v309 = vpop.f32.mrb[0].mxu0
  %310 = vdwg.mxu0
  %vm311 = vcmp.gt.f32.partialorder %v305, 0.0
  %vm312 = vcmp.gt.f32.partialorder %v308, 0.0
  %v313 = vmul.f32 %v305, 0.1
  %v314 = vmul.f32 %v308, 0.1
  %v315 = vsel %vm311, %v305, %v313
  %v316 = vsel %vm312, %v308, %v314
  %v317 = vld [vmem:[%s7] sm:$0xff]
  %v318 = vld [vmem:[%s7 + $0x8] sm:$0xff]
  %320 = vset.pattern.permute.xlu0 0
  %321 = vperm.xlu0 %320, %v317
  %v322 = vpop.permute.xlu0 %321
  %325 = vset.pattern.permute.xlu0 0
  %326 = vperm.xlu0 %325, %v318
  %v327 = vpop.permute.xlu0 %326
  %v329 = vmul.f32 %v315, %v322
  %v330 = vmul.f32 %v316, %v327
  %v331 = vadd.f32 %v329, %v330
  %v332 = vrot.slane %v331, 4
  %v333 = vadd.f32 %v331, %v332
  %v334 = vrot.slane %v333, 2
  %v335 = vadd.f32 %v333, %v334
  %v336 = vrot.slane %v335, 1
  %v337 = vadd.f32 %v335, %v336
  %v338 = vld [vmem:[#allocation2] sm:$0x1]
  %340 = vset.pattern.permute.xlu0 0
  %341 = vperm.xlu0 %340, %v338
  %v342 = vpop.permute.xlu0 %341
  %v344 = vlaneseq
  %v345 = vshrl.u32 %v344, 7
  %v346 = vsub.s32 0, %v345
  %v347 = vrot.slane %v342, %v346
  %v348 = vadd.f32 %v337, %v347
  %v349 = vsub.f32 0.0, %v348
  %v350 = vmul.f32 %v349, 1.442695
  %v351 = vpow.pop %v350
  %v352 = vadd.f32 %v351, 1.0
  %v353 = vrcp.pop %v352
  %354 = vst [vmem:[%s9] sm:$0x1] %v353
  // Predicated region
  $region38: #{net_forward.1} parent=0 // pred_check
    _
  $region39: #{net_forward.1} parent=0 // pred_check_branch
    %356 = sbr.rel (0) target = $region41
  $region40: #{net_forward.1} parent=0 // pred_region
    _
  $region41: #{net_forward.1} parent=0 // pred_fallthru
    _
  // Predicated region
  $region42: #{net_forward.1} parent=0 // pred_check
    _
  $region43: #{net_forward.1} parent=0 // pred_check_branch
    %358 = sbr.rel (0) target = $region45
  $region44: #{net_forward.1} parent=0 // pred_region
    _
  $region45: #{net_forward.1} parent=0 // pred_fallthru
    _

</llo_original>
